<compile_context>
chip_gen: v7x
topology: tpu7x:2x2x1
jax: 0.10.0
libtpu: 0.0.40
codegen_flags: <defaults>
</compile_context>

<pallas_src>
import functools

import jax
import jax.numpy as jnp
from jax import lax
from jax.experimental import pallas as pl
from jax.experimental.pallas import tpu as pltpu


def _lmi_kernel(gamma_ref, gt_ref, c_ref, ct_ref, p_ref, out_ref):
    """One grid step processes a block of BB systems.

    gamma_ref : SMEM (1, 1)       gamma
    gt_ref    : (BB, nx+nu, nx)   [A | B]^T
    c_ref     : (BB, ny, nx)      C
    ct_ref    : (BB, nx, ny)      C^T
    p_ref     : (BB, nx, nx)      P
    out_ref   : (BB, n, n)        -M,  n = nx + nu + ny
    """
    f32 = jnp.float32
    g = gamma_ref[0, 0]
    Gt = gt_ref[...]
    C = c_ref[...]
    Ct = ct_ref[...]
    P = p_ref[...]

    BB, m, nx = Gt.shape            # m = nx + nu
    nu = m - nx
    ny = C.shape[1]
    n = m + ny

    # ---- fused quadratic term: S = [A|B|0]^T P [A|B|0] ---------------------
    # Pad Gt with ny zero rows so S directly covers the full n x n output
    # (zero over the C / gamma blocks).  Two batched MXU matmuls total.
    GtF = jnp.concatenate([Gt, jnp.zeros((BB, ny, nx), f32)], axis=1)    # (BB, n, nx)
    W = jnp.einsum('bij,bjk->bik', GtF, P,
                   preferred_element_type=f32)                           # (BB, n, nx)
    S = jnp.einsum('bij,bkj->bik', W, GtF,
                   preferred_element_type=f32)                           # (BB, n, n)

    # ---- affine correction, assembled fully in vregs (no HBM intermediates) --
    # corr = [[P, 0, -C^T], [0, 0, 0], [-C, 0, 0]]
    row1 = jnp.concatenate(
        [P, jnp.zeros((BB, nx, nu), f32), -Ct], axis=2)                  # (BB, nx, n)
    row2 = jnp.zeros((BB, nu, n), f32)                                   # (BB, nu, n)
    row3 = jnp.concatenate(
        [-C, jnp.zeros((BB, ny, nu + ny), f32)], axis=2)                 # (BB, ny, n)
    corr = jnp.concatenate([row1, row2, row3], axis=1)                   # (BB, n, n)

    # diag(0_{nx}, +gamma*1_{nu}, -gamma*1_{ny}) via iota masks (VPU filler).
    ri = lax.broadcasted_iota(jnp.int32, (n, n), 0)
    ci = lax.broadcasted_iota(jnp.int32, (n, n), 1)
    on_diag = ri == ci
    diag = (jnp.where(on_diag & (ri >= nx) & (ri < m), g, 0.0)
            + jnp.where(on_diag & (ri >= m), -g, 0.0))                   # (n, n)

    # Single full-tile store of -M.
    out_ref[...] = (corr - S) + diag


def _pick_block_batch(bsz, bytes_per_system, vmem_budget_bytes=4 << 20):
    """Largest batch-block that divides bsz, keeps the double-buffered I/O-block
    footprint well under the scoped-VMEM default on v5e/v6e/v7x, and leaves at
    least 2 grid steps (when possible) so the "parallel" grid axis can land work
    on both v7x TensorCores."""
    cap = max(1, vmem_budget_bytes // max(1, 2 * bytes_per_system))
    bb = min(bsz, cap)
    if bsz >= 2:
        bb = min(bb, max(1, bsz // 2))
    bb = max(1, bb)
    while bsz % bb:
        bb -= 1
    return bb


def lmi_hinf_dist_discrete_batched(A, B, C, P, gamma, *, block_batch=None):
    """Batched LMI forward: A (b,nx,nx), B (b,nx,nu), C (b,ny,nx), P (b,nx,nx).

    Returns -M of shape (b, nx+nu+ny, nx+nu+ny).
    """
    A = jnp.asarray(A, jnp.float32)
    B = jnp.asarray(B, jnp.float32)
    C = jnp.asarray(C, jnp.float32)
    P = jnp.asarray(P, jnp.float32)

    bsz, nx, _ = A.shape
    nu = B.shape[2]
    ny = C.shape[1]
    m = nx + nu
    n = m + ny

    # Layout plumbing only (tiny, ~2 KiB/system): pre-transposed operands so the
    # kernel uses only standard ('bij,bjk') and rhs-transposed ('bij,bkj')
    # batched matmuls.  Everything else (gamma*I, zero blocks, the n x n corr
    # matrix) is built inside the kernel.
    Gt = jnp.transpose(jnp.concatenate([A, B], axis=2), (0, 2, 1))       # (b, m, nx)
    Ct = jnp.transpose(C, (0, 2, 1))                                     # (b, nx, ny)
    gamma_arr = jnp.full((1, 1), gamma, dtype=jnp.float32)               # SMEM scalar

    bytes_per_system = 4 * (m * nx + ny * nx + nx * ny + nx * nx + n * n)
    BB = block_batch if block_batch is not None else _pick_block_batch(
        bsz, bytes_per_system)
    assert bsz % BB == 0, (bsz, BB)
    grid = (bsz // BB,)

    grid_spec = pltpu.PrefetchScalarGridSpec(
        num_scalar_prefetch=0,
        grid=grid,
        in_specs=[
            pl.BlockSpec(memory_space=pltpu.MemorySpace.SMEM),           # gamma
            pl.BlockSpec((BB, m, nx), lambda i: (i, 0, 0)),              # [A|B]^T
            pl.BlockSpec((BB, ny, nx), lambda i: (i, 0, 0)),             # C
            pl.BlockSpec((BB, nx, ny), lambda i: (i, 0, 0)),             # C^T
            pl.BlockSpec((BB, nx, nx), lambda i: (i, 0, 0)),             # P
        ],
        out_specs=pl.BlockSpec((BB, n, n), lambda i: (i, 0, 0)),
    )
    return pl.pallas_call(
        _lmi_kernel,
        out_shape=jax.ShapeDtypeStruct((bsz, n, n), jnp.float32),
        grid_spec=grid_spec,
        compiler_params=pltpu.CompilerParams(
            dimension_semantics=("parallel",)),   # shards batch blocks across TCs
    )(gamma_arr, Gt, C, Ct, P)


def lmi_hinf_dist_discrete(A, B, C, P, gamma):
    """Single-system module forward (returns -M), implemented as batch=1."""
    out = lmi_hinf_dist_discrete_batched(A[None], B[None], C[None], P[None], gamma)
    return out[0]


def lmi_reference(A, B, C, P, gamma):
    """Pure-JAX reference for verification (intended module semantics)."""
    nu = B.shape[1]
    ny = C.shape[0]
    AtP = A.T @ P
    M11 = AtP @ A - P
    M12 = AtP @ B
    M13 = C.T
    M22 = B.T @ P @ B - gamma * jnp.eye(nu, dtype=jnp.float32)
    M23 = jnp.zeros((nu, ny), dtype=jnp.float32)
    M33 = gamma * jnp.eye(ny, dtype=jnp.float32)
    row1 = jnp.concatenate([M11, M12, M13], axis=1)
    row2 = jnp.concatenate([M12.T, M22, M23], axis=1)
    row3 = jnp.concatenate([M13.T, M23.T, M33], axis=1)
    return -jnp.concatenate([row1, row2, row3], axis=0)


if __name__ == "__main__":
    nx, nu, ny = 16, 8, 8
    gamma = 0.5          # exactly representable
    bsz = 4
    n = nx + nu + ny

    key = jax.random.PRNGKey(0)
    k_a, k_b, k_c, k_p = jax.random.split(key, 4)

    # Deterministic integer-valued f32 inputs: every matmul intermediate/result
    # is a small exactly-representable integer, so kernel-vs-reference agreement
    # is independent of MXU f32-pass / bf16 precision choices.
    Ab = jax.random.randint(k_a, (bsz, nx, nx), -1, 2).astype(jnp.float32)
    Bb = jax.random.randint(k_b, (bsz, nx, nu), -1, 2).astype(jnp.float32)
    Cb = jax.random.randint(k_c, (bsz, ny, nx), -1, 2).astype(jnp.float32)
    Wp = jax.random.randint(k_p, (bsz, nx, nx), -1, 2).astype(jnp.float32)
    # Symmetric P (stand-in for the geotorch-PSD-parametrized nn.Linear weight).
    Pb = Wp + jnp.transpose(Wp, (0, 2, 1))

    # ---- single-system forward (module semantics) ----
    out1 = lmi_hinf_dist_discrete(Ab[0], Bb[0], Cb[0], Pb[0], gamma)
    out1 = jax.block_until_ready(out1)
    ref1 = lmi_reference(Ab[0], Bb[0], Cb[0], Pb[0], gamma)
    assert out1.shape == (n, n)
    err1 = float(jnp.max(jnp.abs(out1 - ref1)))
    assert err1 < 1e-5, f"single-system mismatch: max abs err {err1}"

    # ---- batched forward (batch-blocked grid, 2 parallel steps) ----
    outb = lmi_hinf_dist_discrete_batched(Ab, Bb, Cb, Pb, gamma)
    outb = jax.block_until_ready(outb)
    refb = jax.vmap(functools.partial(lmi_reference, gamma=gamma))(Ab, Bb, Cb, Pb)
    assert outb.shape == (bsz, n, n)
    errb = float(jnp.max(jnp.abs(outb - refb)))
    assert errb < 1e-5, f"batched mismatch: max abs err {errb}"

    print("KERNEL_OK")
</pallas_src>

<mosaic_0001>
module attributes {stable_mosaic.version = 11 : i64} {
  func.func @_lmi_kernel(%arg0: i32, %arg1: memref<1x1xf32, #tpu.memory_space<smem>>, %arg2: memref<1x24x16xf32, #tpu.memory_space<vmem>>, %arg3: memref<1x8x16xf32, #tpu.memory_space<vmem>>, %arg4: memref<1x16x8xf32, #tpu.memory_space<vmem>>, %arg5: memref<1x16x16xf32, #tpu.memory_space<vmem>>, %arg6: memref<1x32x32xf32, #tpu.memory_space<vmem>>) attributes {dimension_semantics = [#tpu.dimension_semantics<parallel>], iteration_bounds = array<i64: 1>, scalar_prefetch = 0 : i64, scratch_operands = 0 : i64, tpu.core_type = #tpu.core_type<tc>, window_params = [{transform_indices = @transform_0, window_bounds = array<i64: 1, 1>}, {transform_indices = @transform_1, window_bounds = array<i64: 1, 24, 16>}, {transform_indices = @transform_2, window_bounds = array<i64: 1, 8, 16>}, {transform_indices = @transform_3, window_bounds = array<i64: 1, 16, 8>}, {transform_indices = @transform_4, window_bounds = array<i64: 1, 16, 16>}, {transform_indices = @transform_5, window_bounds = array<i64: 1, 32, 32>}]} {
    %c0 = arith.constant 0 : index
    %c0_0 = arith.constant 0 : index
    %0 = memref.load %arg1[%c0, %c0_0] : memref<1x1xf32, #tpu.memory_space<smem>>
    %c0_1 = arith.constant 0 : index
    %c0_2 = arith.constant 0 : index
    %c0_3 = arith.constant 0 : index
    %1 = vector.load %arg2[%c0_1, %c0_2, %c0_3] : memref<1x24x16xf32, #tpu.memory_space<vmem>>, vector<1x24x16xf32>
    %c0_4 = arith.constant 0 : index
    %c0_5 = arith.constant 0 : index
    %c0_6 = arith.constant 0 : index
    %2 = vector.load %arg3[%c0_4, %c0_5, %c0_6] : memref<1x8x16xf32, #tpu.memory_space<vmem>>, vector<1x8x16xf32>
    %c0_7 = arith.constant 0 : index
    %c0_8 = arith.constant 0 : index
    %c0_9 = arith.constant 0 : index
    %3 = vector.load %arg4[%c0_7, %c0_8, %c0_9] : memref<1x16x8xf32, #tpu.memory_space<vmem>>, vector<1x16x8xf32>
    %c0_10 = arith.constant 0 : index
    %c0_11 = arith.constant 0 : index
    %c0_12 = arith.constant 0 : index
    %4 = vector.load %arg5[%c0_10, %c0_11, %c0_12] : memref<1x16x16xf32, #tpu.memory_space<vmem>>, vector<1x16x16xf32>
    %cst = arith.constant 0.000000e+00 : f32
    %5 = vector.broadcast %cst : f32 to vector<1x8x16xf32>
    %6 = tpu.concatenate %1, %5 in 1 : vector<1x24x16xf32>, vector<1x8x16xf32> -> vector<1x32x16xf32>
    "tpu.trace_start"() <{level = 10 : i32, message = "bij,bjk->bik"}> : () -> ()
    %cst_13 = arith.constant dense<0.000000e+00> : vector<1x32x16xf32>
    %7 = tpu.matmul %6, %4, %cst_13 {dimension_numbers = #tpu.dot_dimension_numbers<[2], [1], [1], [2], [0, 0, 0, 1, 1, 2], [0], [0]>} : vector<1x32x16xf32>, vector<1x16x16xf32>, vector<1x32x16xf32> -> vector<1x32x16xf32>
    "tpu.trace_stop"() : () -> ()
    "tpu.trace_start"() <{level = 10 : i32, message = "bij,bkj->bik"}> : () -> ()
    %cst_14 = arith.constant dense<0.000000e+00> : vector<1x32x32xf32>
    %8 = tpu.matmul %7, %6, %cst_14 {dimension_numbers = #tpu.dot_dimension_numbers<[2], [2], [1], [1], [0, 0, 0, 1, 1, 1], [0], [0]>} : vector<1x32x16xf32>, vector<1x32x16xf32>, vector<1x32x32xf32> -> vector<1x32x32xf32>
    %cst_15 = arith.constant 0.000000e+00 : f32
    "tpu.trace_stop"() : () -> ()
    %9 = vector.broadcast %cst_15 : f32 to vector<1x16x8xf32>
    %cst_16 = arith.constant 0.000000e+00 : f32
    %10 = vector.broadcast %cst_16 : f32 to vector<1x16x8xf32>
    %11 = arith.subf %10, %3 : vector<1x16x8xf32>
    %12 = tpu.concatenate %4, %9, %11 in 2 : vector<1x16x16xf32>, vector<1x16x8xf32>, vector<1x16x8xf32> -> vector<1x16x32xf32>
    %cst_17 = arith.constant 0.000000e+00 : f32
    %13 = vector.broadcast %cst_17 : f32 to vector<1x8x32xf32>
    %cst_18 = arith.constant 0.000000e+00 : f32
    %14 = vector.broadcast %cst_18 : f32 to vector<1x8x16xf32>
    %15 = arith.subf %14, %2 : vector<1x8x16xf32>
    %cst_19 = arith.constant 0.000000e+00 : f32
    %16 = vector.broadcast %cst_19 : f32 to vector<1x8x16xf32>
    %17 = tpu.concatenate %15, %16 in 2 : vector<1x8x16xf32>, vector<1x8x16xf32> -> vector<1x8x32xf32>
    %18 = tpu.concatenate %12, %13, %17 in 1 : vector<1x16x32xf32>, vector<1x8x32xf32>, vector<1x8x32xf32> -> vector<1x32x32xf32>
    %19 = tpu.iota {dimensions = array<i32: 0>} : vector<32x32xi32>
    %20 = tpu.iota {dimensions = array<i32: 1>} : vector<32x32xi32>
    %21 = arith.cmpi eq, %19, %20 : vector<32x32xi32>
    %c16_i32 = arith.constant 16 : i32
    %22 = vector.broadcast %c16_i32 : i32 to vector<32x32xi32>
    %23 = arith.cmpi sge, %19, %22 : vector<32x32xi32>
    %24 = arith.andi %21, %23 : vector<32x32xi1>
    %c24_i32 = arith.constant 24 : i32
    %25 = vector.broadcast %c24_i32 : i32 to vector<32x32xi32>
    %26 = arith.cmpi slt, %19, %25 : vector<32x32xi32>
    %27 = arith.andi %24, %26 : vector<32x32xi1>
    %cst_20 = arith.constant 0.000000e+00 : f32
    %28 = vector.broadcast %0 : f32 to vector<32x32xf32>
    %29 = vector.broadcast %cst_20 : f32 to vector<32x32xf32>
    %30 = arith.select %27, %28, %29 : vector<32x32xi1>, vector<32x32xf32>
    %c24_i32_21 = arith.constant 24 : i32
    %31 = vector.broadcast %c24_i32_21 : i32 to vector<32x32xi32>
    %32 = arith.cmpi sge, %19, %31 : vector<32x32xi32>
    %33 = arith.andi %21, %32 : vector<32x32xi1>
    %cst_22 = arith.constant 0.000000e+00 : f32
    %34 = arith.subf %cst_22, %0 : f32
    %cst_23 = arith.constant 0.000000e+00 : f32
    %35 = vector.broadcast %34 : f32 to vector<32x32xf32>
    %36 = vector.broadcast %cst_23 : f32 to vector<32x32xf32>
    %37 = arith.select %33, %35, %36 : vector<32x32xi1>, vector<32x32xf32>
    %38 = arith.addf %30, %37 : vector<32x32xf32>
    %39 = arith.subf %18, %8 : vector<1x32x32xf32>
    %40 = vector.shape_cast %38 : vector<32x32xf32> to vector<1x32x32xf32>
    %41 = arith.addf %39, %40 : vector<1x32x32xf32>
    %c0_24 = arith.constant 0 : index
    %c0_25 = arith.constant 0 : index
    %c0_26 = arith.constant 0 : index
    %42 = vector.load %arg6[%c0_24, %c0_25, %c0_26] : memref<1x32x32xf32, #tpu.memory_space<vmem>>, vector<1x32x32xf32>
    tpu.vector_store %arg6[%c0_24, %c0_25, %c0_26], %41 {strides = array<i32>} : memref<1x32x32xf32, #tpu.memory_space<vmem>>, vector<1x32x32xf32>,
    return
  }
  func.func @transform_0(%arg0: i32) -> (i32, i32) {
    %c0_i32 = arith.constant 0 : i32
    %c0_i32_0 = arith.constant 0 : i32
    %c0_i32_1 = arith.constant 0 : i32
    return %c0_i32, %c0_i32_0 : i32, i32
  }
  func.func @transform_1(%arg0: i32) -> (i32, i32, i32) {
    %c0_i32 = arith.constant 0 : i32
    %c0_i32_0 = arith.constant 0 : i32
    %c0_i32_1 = arith.constant 0 : i32
    return %arg0, %c0_i32, %c0_i32_0 : i32, i32, i32
  }
  func.func @transform_2(%arg0: i32) -> (i32, i32, i32) {
    %c0_i32 = arith.constant 0 : i32
    %c0_i32_0 = arith.constant 0 : i32
    %c0_i32_1 = arith.constant 0 : i32
    return %arg0, %c0_i32, %c0_i32_0 : i32, i32, i32
  }
  func.func @transform_3(%arg0: i32) -> (i32, i32, i32) {
    %c0_i32 = arith.constant 0 : i32
    %c0_i32_0 = arith.constant 0 : i32
    %c0_i32_1 = arith.constant 0 : i32
    return %arg0, %c0_i32, %c0_i32_0 : i32, i32, i32
  }
  func.func @transform_4(%arg0: i32) -> (i32, i32, i32) {
    %c0_i32 = arith.constant 0 : i32
    %c0_i32_0 = arith.constant 0 : i32
    %c0_i32_1 = arith.constant 0 : i32
    return %arg0, %c0_i32, %c0_i32_0 : i32, i32, i32
  }
  func.func @transform_5(%arg0: i32) -> (i32, i32, i32) {
    %c0_i32 = arith.constant 0 : i32
    %c0_i32_0 = arith.constant 0 : i32
    %c0_i32_1 = arith.constant 0 : i32
    return %arg0, %c0_i32, %c0_i32_0 : i32, i32, i32
  }
}

</mosaic_0001>

<llo_original>
// kernel: tpu_custom_call.1
$region0: #{tpu_custom_call.1}
  #allocation0 [shape = 'u32[]', space=smem, size = 0x4, offset = 0x4, fixed_abs, tag = 'smem constant byte address 0x4 - core index']
  #allocation1 [shape = 'u32[144,128]{1,0:T(1,128)}', space=vmem, size = 0x12000, scoped, tag = 'internal scratch']
  #allocation2 [shape = 'f32[1,1]{1,0:T(1,128)S(6)}', space=smem, size = 0x200, scoped, tag = 'scoped memory for tpu_custom_call.1']
  %s0 = inlined_call_operand.<no memory space> [shape: f32[1,1], index: 0, kind: input, shape index: {}]
  %s1 = inlined_call_operand.vmem [shape: f32[1,24,16], index: 1, kind: input, shape index: {}]
  %s2 = inlined_call_operand.vmem [shape: f32[1,8,16], index: 2, kind: input, shape index: {}]
  %s3 = inlined_call_operand.vmem [shape: f32[1,16,8], index: 3, kind: input, shape index: {}]
  %s4 = inlined_call_operand.vmem [shape: f32[1,16,16], index: 4, kind: input, shape index: {}]
  %s5 = inlined_call_operand.hbm [shape: f32[1,32,32], index: 5, kind: output, shape index: {}]
  %s6 = sld [smem:[#allocation0]]
  $region30: #{tpu_custom_call.1} parent=0
    _
  %s8 = ssub.s32 1, %s6
  %s9 = scalar_select 0, %s8, %s6
  %10 = sst [smem:[#allocation2]] %s0
  $region1: #{tpu_custom_call.1} parent=0
    #allocation3 [shape = 'u8[16384]{0}', space=vmem, size = 0x4000, scoped, tag = 'output window, operand 0, single buffered']
    #allocation4 [shape = 's32[1]{0}', space=sflag, size = 0x4, scoped, tag = 'scoped memory for tpu_custom_call.1']
    %11 = vsyncpa [#allocation4], 0
    // Predicated region
    $region2: #{tpu_custom_call.1} parent=1 // pred_check
      _
    $region3: #{tpu_custom_call.1} parent=1 // pred_check_branch
      %13 = sbr.rel (0) target = $region5
    $region4: #{tpu_custom_call.1} parent=1 // pred_region
      _
    $region5: #{tpu_custom_call.1} parent=1 // pred_fallthru
      _
    // Predicated region
    $region6: #{tpu_custom_call.1} parent=1 // pred_check
      _
    $region7: #{tpu_custom_call.1} parent=1 // pred_check_branch
      %15 = sbr.rel (0) target = $region9
    $region8: #{tpu_custom_call.1} parent=1 // pred_region
      _
    $region9: #{tpu_custom_call.1} parent=1 // pred_fallthru
      _
    // Predicated region
    $region10: #{tpu_custom_call.1} parent=1 // pred_check
      _
    $region11: #{tpu_custom_call.1} parent=1 // pred_check_branch
      %17 = sbr.rel (0) target = $region13
    $region12: #{tpu_custom_call.1} parent=1 // pred_region
      _
    $region13: #{tpu_custom_call.1} parent=1 // pred_fallthru
      _
    // Predicated region
    $region14: #{tpu_custom_call.1} parent=1 // pred_check
      _
    $region15: #{tpu_custom_call.1} parent=1 // pred_check_branch
      %19 = sbr.rel (0) target = $region17
    $region16: #{tpu_custom_call.1} parent=1 // pred_region
      _
    $region17: #{tpu_custom_call.1} parent=1 // pred_fallthru
      _
    // Predicated region
    $region18: #{tpu_custom_call.1} parent=1 // pred_check
      _
    $region19: #{tpu_custom_call.1} parent=1 // pred_check_branch
      %21 = sbr.rel (0) target = $region21
    $region20: #{tpu_custom_call.1} parent=1 // pred_region
      _
    $region21: #{tpu_custom_call.1} parent=1 // pred_fallthru
      _
    %s22 = sld [smem:[#allocation2]]
    %v23 = vld [vmem:[%s1] sm:$0xff]
    %v24 = vld [vmem:[%s1 + $0x8] sm:$0xff]
    %v25 = vld [vmem:[%s1 + $0x10] sm:$0xff]
    %v26 = vld [vmem:[%s2] sm:$0xff]
    %v27 = vld [vmem:[%s3] sm:$0xff]
    %v28 = vld [vmem:[%s3 + $0x8] sm:$0xff]
    %v29 = vld [vmem:[%s4] sm:$0xff]
    %v30 = vld [vmem:[%s4 + $0x8] sm:$0xff]
    %vm31 = vcmask 130048
    %v33 = vsel %vm31, %v23, 0
    %v36 = vsel %vm31, %v24, 0
    %v39 = vsel %vm31, %v25, 0
    %v42 = vsel %vm31, 0.0, 0
    %44 = vmatprep.subr.mxu0 0.0
    %45 = vmatpush1.msra.mxu0 %v29
    %46 = vmatprep.subr.mxu0 0.0
    %47 = vmatpush1.msra.mxu0 %v30
    %48 = vmatprep.subr.mxu0 0.0
    %49 = vmatpush1.msra.mxu0 0.0
    %50 = vmatprep.subr.mxu0 0.0
    %51 = vmatpush1.msra.mxu0 0.0
    %52 = vmatprep.subr.mxu0 0.0
    %53 = vmatpush1.msra.mxu0 0.0
    %54 = vmatprep.subr.mxu0 0.0
    %55 = vmatpush1.msra.mxu0 0.0
    %56 = vmatprep.subr.mxu0 0.0
    %57 = vmatpush1.msra.mxu0 0.0
    %58 = vmatprep.subr.mxu0 0.0
    %59 = vmatpush1.msra.mxu0 0.0
    %60 = vmatprep.subr.mxu0 0.0
    %61 = vmatpush1.msra.mxu0 0.0
    %62 = vmatprep.subr.mxu0 0.0
    %63 = vmatpush1.msra.mxu0 0.0
    %64 = vmatprep.subr.mxu0 0.0
    %65 = vmatpush1.msra.mxu0 0.0
    %66 = vmatprep.subr.mxu0 0.0
    %67 = vmatpush1.msra.mxu0 0.0
    %68 = vmatprep.subr.mxu0 0.0
    %69 = vmatpush1.msra.mxu0 0.0
    %70 = vmatprep.subr.mxu0 0.0
    %71 = vmatpush1.msra.mxu0 0.0
    %72 = vmatprep.subr.mxu0 0.0
    %73 = vmatpush1.msra.mxu0 0.0
    %74 = vmatprep.subr.mxu0 0.0
    %75 = vmatpush1.msra.mxu0 0.0
    %76 = vmatprep.subr.mxu0 0.0
    %77 = vmatpush1.msra.mxu0 0.0
    %78 = vmatprep.subr.mxu0 0.0
    %79 = vmatpush1.msra.mxu0 0.0
    %80 = vmatprep.subr.mxu0 0.0
    %81 = vmatpush1.msra.mxu0 0.0
    %82 = vmatprep.subr.mxu0 0.0
    %83 = vmatpush1.msra.mxu0 0.0
    %84 = vmatprep.subr.mxu0 0.0
    %85 = vmatpush1.msra.mxu0 0.0
    %86 = vmatprep.subr.mxu0 0.0
    %87 = vmatpush1.msra.mxu0 0.0
    %88 = vmatprep.subr.mxu0 0.0
    %89 = vmatpush1.msra.mxu0 0.0
    %90 = vmatprep.subr.mxu0 0.0
    %91 = vmatpush1.msra.mxu0 0.0
    %92 = vmatprep.subr.mxu0 0.0
    %93 = vmatpush1.msra.mxu0 0.0
    %94 = vmatprep.subr.mxu0 0.0
    %95 = vmatpush1.msra.mxu0 0.0
    %96 = vmatprep.subr.mxu0 0.0
    %97 = vmatpush1.msra.mxu0 0.0
    %98 = vmatprep.subr.mxu0 0.0
    %99 = vmatpush1.msra.mxu0 0.0
    %100 = vmatprep.subr.mxu0 0.0
    %101 = vmatpush1.msra.mxu0 0.0
    %102 = vmatprep.subr.mxu0 0.0
    %103 = vmatpush1.msra.mxu0 0.0
    %104 = vmatprep.subr.mxu0 0.0
    %105 = vmatpush1.msra.mxu0 0.0
    %106 = vmatprep.subr.mxu0 0.0
    %107 = vmatpush1.msra.mxu0 0.0
    %108 = vmatprep.mubr.f32.mxu0 0.0
    %109 = vmatmul.mubr.f32.gmra.mrb[0].mxu0 %v33
    %v110 = vpop.f32.mrb[0].mxu0
    %v111 = vadd.f32 0.0, %v110
    %v112 = vpop.f32.mrb[0].mxu0
    %113 = vmatprep.mubr.f32.mxu0 0.0
    %114 = vmatmul.mubr.f32.gmra.mrb[0].mxu0 %v36
    %v115 = vpop.f32.mrb[0].mxu0
    %v116 = vadd.f32 0.0, %v115
    %v117 = vpop.f32.mrb[0].mxu0
    %118 = vmatprep.mubr.f32.mxu0 0.0
    %119 = vmatmul.mubr.f32.gmra.mrb[0].mxu0 %v39
    %v120 = vpop.f32.mrb[0].mxu0
    %v121 = vadd.f32 0.0, %v120
    %v122 = vpop.f32.mrb[0].mxu0
    %123 = vmatprep.mubr.f32.mxu0 0.0
    %124 = vmatmul.mubr.f32.gmra.mrb[0].mxu0 %v42
    %v125 = vpop.f32.mrb[0].mxu0
    %v126 = vadd.f32 0.0, %v125
    %v127 = vpop.f32.mrb[0].mxu0
    %128 = vdwg.mxu0
    %v130 = vsel %vm31, %v111, 0
    %v133 = vsel %vm31, %v116, 0
    %v136 = vsel %vm31, %v121, 0
    %v139 = vsel %vm31, %v126, 0
    %141 = vmatprep.subr.mxu0 0.0
    %142 = vmatpush1.xpose.msra.mxu0 %v33
    %143 = vmatprep.subr.mxu0 0.0
    %144 = vmatpush1.xpose.msra.mxu0 %v36
    %145 = vmatprep.subr.mxu0 0.0
    %146 = vmatpush1.xpose.msra.mxu0 %v39
    %147 = vmatprep.subr.mxu0 0.0
    %148 = vmatpush1.xpose.msra.mxu0 %v42
    %149 = vmatprep.subr.mxu0 0.0
    %150 = vmatpush1.xpose.msra.mxu0 0.0
    %151 = vmatprep.subr.mxu0 0.0
    %152 = vmatpush1.xpose.msra.mxu0 0.0
    %153 = vmatprep.subr.mxu0 0.0
    %154 = vmatpush1.xpose.msra.mxu0 0.0
    %155 = vmatprep.subr.mxu0 0.0
    %156 = vmatpush1.xpose.msra.mxu0 0.0
    %157 = vmatprep.subr.mxu0 0.0
    %158 = vmatpush1.xpose.msra.mxu0 0.0
    %159 = vmatprep.subr.mxu0 0.0
    %160 = vmatpush1.xpose.msra.mxu0 0.0
    %161 = vmatprep.subr.mxu0 0.0
    %162 = vmatpush1.xpose.msra.mxu0 0.0
    %163 = vmatprep.subr.mxu0 0.0
    %164 = vmatpush1.xpose.msra.mxu0 0.0
    %165 = vmatprep.subr.mxu0 0.0
    %166 = vmatpush1.xpose.msra.mxu0 0.0
    %167 = vmatprep.subr.mxu0 0.0
    %168 = vmatpush1.xpose.msra.mxu0 0.0
    %169 = vmatprep.subr.mxu0 0.0
    %170 = vmatpush1.xpose.msra.mxu0 0.0
    %171 = vmatprep.subr.mxu0 0.0
    %172 = vmatpush1.xpose.msra.mxu0 0.0
    %173 = vmatprep.subr.mxu0 0.0
    %174 = vmatpush1.xpose.msra.mxu0 0.0
    %175 = vmatprep.subr.mxu0 0.0
    %176 = vmatpush1.xpose.msra.mxu0 0.0
    %177 = vmatprep.subr.mxu0 0.0
    %178 = vmatpush1.xpose.msra.mxu0 0.0
    %179 = vmatprep.subr.mxu0 0.0
    %180 = vmatpush1.xpose.msra.mxu0 0.0
    %181 = vmatprep.subr.mxu0 0.0
    %182 = vmatpush1.xpose.msra.mxu0 0.0
    %183 = vmatprep.subr.mxu0 0.0
    %184 = vmatpush1.xpose.msra.mxu0 0.0
    %185 = vmatprep.subr.mxu0 0.0
    %186 = vmatpush1.xpose.msra.mxu0 0.0
    %187 = vmatprep.subr.mxu0 0.0
    %188 = vmatpush1.xpose.msra.mxu0 0.0
    %189 = vmatprep.subr.mxu0 0.0
    %190 = vmatpush1.xpose.msra.mxu0 0.0
    %191 = vmatprep.subr.mxu0 0.0
    %192 = vmatpush1.xpose.msra.mxu0 0.0
    %193 = vmatprep.subr.mxu0 0.0
    %194 = vmatpush1.xpose.msra.mxu0 0.0
    %195 = vmatprep.subr.mxu0 0.0
    %196 = vmatpush1.xpose.msra.mxu0 0.0
    %197 = vmatprep.subr.mxu0 0.0
    %198 = vmatpush1.xpose.msra.mxu0 0.0
    %199 = vmatprep.subr.mxu0 0.0
    %200 = vmatpush1.xpose.msra.mxu0 0.0
    %201 = vmatprep.subr.mxu0 0.0
    %202 = vmatpush1.xpose.msra.mxu0 0.0
    %203 = vmatprep.subr.mxu0 0.0
    %204 = vmatpush1.xpose.msra.mxu0 0.0
    %205 = vmatprep.mubr.f32.mxu0 0.0
    %206 = vmatmul.mubr.f32.gmra.mrb[0].mxu0 %v130
    %v207 = vpop.f32.mrb[0].mxu0
    %v208 = vadd.f32 0.0, %v207
    %v209 = vpop.f32.mrb[0].mxu0
    %210 = vmatprep.mubr.f32.mxu0 0.0
    %211 = vmatmul.mubr.f32.gmra.mrb[0].mxu0 %v133
    %v212 = vpop.f32.mrb[0].mxu0
    %v213 = vadd.f32 0.0, %v212
    %v214 = vpop.f32.mrb[0].mxu0
    %215 = vmatprep.mubr.f32.mxu0 0.0
    %216 = vmatmul.mubr.f32.gmra.mrb[0].mxu0 %v136
    %v217 = vpop.f32.mrb[0].mxu0
    %v218 = vadd.f32 0.0, %v217
    %v219 = vpop.f32.mrb[0].mxu0
    %220 = vmatprep.mubr.f32.mxu0 0.0
    %221 = vmatmul.mubr.f32.gmra.mrb[0].mxu0 %v139
    %v222 = vpop.f32.mrb[0].mxu0
    %v223 = vadd.f32 0.0, %v222
    %v224 = vpop.f32.mrb[0].mxu0
    %225 = vdwg.mxu0
    %v226 = vsub.f32 0.0, %v27
    %v227 = vsub.f32 0.0, %v28
    %230 = vrot.lane.b32.xlu0 %v226, 24
    %v231 = vpop.permute.xlu0 %230
    %232 = vrot.lane.b32.xlu0 %v227, 24
    %v233 = vpop.permute.xlu0 %232
    %v236 = vsel %vm31, %v29, 0.0
    %v237 = vsel %vm31, %v30, 0.0
    %vm238 = vcmask 195584
    %v239 = vsel %vm238, %v236, %v231
    %v240 = vsel %vm238, %v237, %v233
    %v241 = vsub.f32 0.0, %v26
    %v242 = vsel %vm31, %v241, 0.0
    %v243 = vlaneseq
    %v244 = vshrl.u32 %v243, 7
    %v245 = vadd.s32 %v244, 8
    %v246 = vadd.s32 %v244, 16
    %v247 = vadd.s32 %v244, 24
    %v248 = vlaneseq
    %v249 = vand.u32 %v248, 127
    %vm250 = vcmp.eq.s32.totalorder %v244, %v249
    %vm251 = vcmp.eq.s32.totalorder %v245, %v249
    %vm252 = vcmp.eq.s32.totalorder %v246, %v249
    %vm253 = vcmp.eq.s32.totalorder %v247, %v249
    %vm254 = vcmp.ge.s32.totalorder %v244, 16
    %vm255 = vcmp.ge.s32.totalorder %v245, 16
    %vm256 = vcmp.ge.s32.totalorder %v246, 16
    %vm257 = vcmp.ge.s32.totalorder %v247, 16
    %vm258 = vmand %vm250, %vm254
    %vm259 = vmand %vm251, %vm255
    %vm260 = vmand %vm252, %vm256
    %vm261 = vmand %vm253, %vm257
    %vm262 = vcmp.lt.s32.totalorder %v244, 24
    %vm263 = vcmp.lt.s32.totalorder %v245, 24
    %vm264 = vcmp.lt.s32.totalorder %v246, 24
    %vm265 = vcmp.lt.s32.totalorder %v247, 24
    %vm266 = vmand %vm258, %vm262
    %vm267 = vmand %vm259, %vm263
    %vm268 = vmand %vm260, %vm264
    %vm269 = vmand %vm261, %vm265
    %v270 = vstv %s22
    %v271 = vsel %vm266, %v270, 0.0
    %v272 = vsel %vm267, %v270, 0.0
    %v273 = vsel %vm268, %v270, 0.0
    %v274 = vsel %vm269, %v270, 0.0
    %vm275 = vcmp.ge.s32.totalorder %v244, 24
    %vm276 = vcmp.ge.s32.totalorder %v245, 24
    %vm277 = vcmp.ge.s32.totalorder %v246, 24
    %vm278 = vcmp.ge.s32.totalorder %v247, 24
    %vm279 = vmand %vm250, %vm275
    %vm280 = vmand %vm251, %vm276
    %vm281 = vmand %vm252, %vm277
    %vm282 = vmand %vm253, %vm278
    %s283 = ssub.f32 0.0, %s22
    %v284 = vstv %s283
    %v285 = vsel %vm279, %v284, 0.0
    %v286 = vsel %vm280, %v284, 0.0
    %v287 = vsel %vm281, %v284, 0.0
    %v288 = vsel %vm282, %v284, 0.0
    %v289 = vadd.f32 %v271, %v285
    %v290 = vadd.f32 %v272, %v286
    %v291 = vadd.f32 %v273, %v287
    %v292 = vadd.f32 %v274, %v288
    %v293 = vsub.f32 %v239, %v208
    %v294 = vsub.f32 %v240, %v213
    %v295 = vsub.f32 0.0, %v218
    %v296 = vsub.f32 %v242, %v223
    %v297 = vadd.f32 %v293, %v289
    %v298 = vadd.f32 %v294, %v290
    %v299 = vadd.f32 %v295, %v291
    %v300 = vadd.f32 %v296, %v292
    %vm301 = vcmask 261120
    %302 = vst.msk [vmem:[#allocation3] sm:$0xff] %vm301, %v297
    %303 = vst.msk [vmem:[#allocation3 + $0x8] sm:$0xff] %vm301, %v298
    %304 = vst.msk [vmem:[#allocation3 + $0x10] sm:$0xff] %vm301, %v299
    %305 = vst.msk [vmem:[#allocation3 + $0x18] sm:$0xff] %vm301, %v300
    // Predicated region
    $region22: #{tpu_custom_call.1} parent=1 // pred_check
      _
    $region23: #{tpu_custom_call.1} parent=1 // pred_check_branch
      %307 = sbr.rel (0) target = $region25
    $region24: #{tpu_custom_call.1} parent=1 // pred_region
      %s309 = ssub.s32 512, 512
      %310 = vsyncadd [#allocation4], %s309
      %s311 = sshll.u32 [#allocation3], 4
      %s312 = int_to_ptr.vmem [resolvable:$true] %s311
      %317 = dma.vmem_to_hbm [thread:$0]  %s312, 512, %s5, [#allocation4], 128, 128, 8
    $region25: #{tpu_custom_call.1} parent=1 // pred_fallthru
      _
    // Predicated region
    $region26: #{tpu_custom_call.1} parent=1 // pred_check
      _
    $region27: #{tpu_custom_call.1} parent=1 // pred_check_branch
      %319 = sbr.rel (0) target = $region29
    $region28: #{tpu_custom_call.1} parent=1 // pred_region
      %320 = dma.done [#allocation4], 512
    $region29: #{tpu_custom_call.1} parent=1 // pred_fallthru
      _
    %321 = vsyncpa [#allocation4], 1

</llo_original>
